<compile_context>
chip_gen: v5e
topology: v5e:2x2
jax: 0.10.0
libtpu: 0.0.40
codegen_flags: <defaults>
</compile_context>

<pallas_src>
import math

import jax
import jax.numpy as jnp
import numpy as np
from jax.experimental import pallas as pl
from jax.experimental.pallas import tpu as pltpu

_WEIGHTS = (1.0, 0.5, 0.25, 0.125, 0.125)


# ---------------------------------------------------------------------------
# Helpers shared by the wrapper and the kernel factory
# ---------------------------------------------------------------------------
def _pad_dim(full, level, min_sz):
    """Spatial extent carried at pyramid `level` inside the kernel.  Deep levels are kept
    zero-padded up to min_sz (8 sublanes / 128 lanes) so all values stay vreg-shaped."""
    if level == 0:
        return full
    return max(full >> level, min(min_sz, full))


def _pick_tile(dim, pool_div, hw_align, max_tile):
    """Largest tile that divides `dim`, is a multiple of pool_div (so the in-tile pooling
    pyramid matches the global one) and of the HW alignment, or the full dim."""
    if dim <= max_tile:
        return dim
    step = pool_div * hw_align // math.gcd(pool_div, hw_align)
    t = (max_tile // step) * step
    while t >= step:
        if dim % t == 0:
            return t
        t -= step
    return dim  # TODO(synk): pad instead of falling back to the full (untiled) dimension.


def _row_pool_matrix(th):
    """(rows, th) banded matrix P, P[i, 2i] = P[i, 2i+1] = 0.5: P @ x halves the sublane
    (H) dim.  Rows beyond th//2 (padding up to 8) are all-zero."""
    rows = max(th // 2, min(8, th))
    r = np.arange(rows)[:, None]
    c = np.arange(th)[None, :]
    return jnp.asarray(np.where(c // 2 == r, 0.5, 0.0).astype(np.float32))


def _col_pool_matrix(tw):
    """(tw, cols) banded matrix P, P[2j, j] = P[2j+1, j] = 0.5: x @ P halves the lane (W)
    dim.  Columns beyond tw//2 (padding up to 128) are all-zero."""
    cols = max(tw // 2, min(128, tw))
    r = np.arange(tw)[:, None]
    c = np.arange(cols)[None, :]
    return jnp.asarray(np.where(r // 2 == c, 0.5, 0.0).astype(np.float32))


# ---------------------------------------------------------------------------
# Fused multiscale-L1 kernel (all scales per tile; MXU pooling; no pyramid scratch for d)
# ---------------------------------------------------------------------------
def _make_kernel(level_scales, th, tw, masked):
    n_levels = len(level_scales)
    has_pool = n_levels > 1
    hp = [_pad_dim(th, k, 8) for k in range(n_levels)]
    wp = [_pad_dim(tw, k, 128) for k in range(n_levels)]

    def kernel(*refs):
        pos = 0
        x_ref = refs[pos]; pos += 1
        y_ref = refs[pos]; pos += 1
        if masked:
            m_ref = refs[pos]; pos += 1
        if has_pool:
            poolh_ref = refs[pos]
            poolw_ref = refs[pos + 1]
            pos += 2
        out_ref = refs[pos]; pos += 1
        m_pyr = refs[pos:]  # pooled-mask VMEM scratch (masked & has_pool only)

        j = pl.program_id(2)   # column-tile axis (arbitrary)
        ch = pl.program_id(3)  # channel axis (arbitrary, innermost)

        @pl.when(jnp.logical_and(j == 0, ch == 0))
        def _():
            out_ref[...] = jnp.zeros_like(out_ref)

        def pool2x2(v, k):
            # 2x2 average pool (level k-1 -> k) on the otherwise-idle MXU.
            # Padding rows/cols of the banded matrices are exactly zero, so padded
            # regions of the pyramid stay zero and add nothing to the sums.
            ph = poolh_ref[0:hp[k], 0:hp[k - 1]]
            pw = poolw_ref[0:wp[k - 1], 0:wp[k]]
            v = jnp.dot(ph, v, preferred_element_type=jnp.float32)   # pool H (sublanes)
            return jnp.dot(v, pw, preferred_element_type=jnp.float32)  # pool W (lanes)

        d = x_ref[0, 0].astype(jnp.float32) - y_ref[0, 0].astype(jnp.float32)

        if masked:
            m0 = m_ref[0, 0].astype(jnp.float32)
            if has_pool:
                # The mask pyramid is channel-independent: build it once per spatial tile
                # (ch == 0) into scratch and reuse it for the remaining C-1 channel steps.
                @pl.when(ch == 0)
                def _():
                    mk = m0
                    for k in range(1, n_levels):
                        mk = pool2x2(mk, k)
                        m_pyr[k - 1][...] = mk
            # |x*m - y*m| == |(x - y) * m|  (pooling is linear, so pool d and m separately)
            total = jnp.float32(level_scales[0]) * jnp.sum(jnp.abs(d * m0))
        else:
            total = jnp.float32(level_scales[0]) * jnp.sum(jnp.abs(d))

        dk = d
        for k in range(1, n_levels):
            dk = pool2x2(dk, k)
            lvl = jnp.abs(dk * m_pyr[k - 1][...]) if masked else jnp.abs(dk)
            total = total + jnp.float32(level_scales[k]) * jnp.sum(lvl)

        out_ref[...] += total

    return kernel


# ---------------------------------------------------------------------------
# Wrapper
# ---------------------------------------------------------------------------
def multiscale_pixel_loss(x, y, mask=None, scale=5, *, max_tile_h=512, max_tile_w=512):
    """Pallas equivalent of MultiscalePixelLoss(loss_f=nn.L1Loss(), scale=scale)(x, y, mask).

    x, y: (N, C, H, W); mask (optional): (N, 1, H, W).  Returns a float32 scalar.
    The masked loss divides by the TOTAL element count (PyTorch L1Loss over x*mask, y*mask).
    Inputs may be bf16 (halves HBM traffic); compute is done in f32 inside the kernel.
    """
    if not 1 <= scale <= len(_WEIGHTS):
        raise ValueError(f"scale must be in [1, {len(_WEIGHTS)}]")
    weights = _WEIGHTS[:scale]
    n, c, h, w = x.shape
    div = 1 << (scale - 1)
    if h % div != 0 or w % div != 0:
        # TODO(synk): support AvgPool2d floor semantics when H/W are not divisible by
        # 2**(scale-1) (odd spatial sizes at deeper pyramid levels).
        raise ValueError(f"H, W must be divisible by 2**(scale-1)={div}; got {(h, w)}")

    itemsize = jnp.dtype(x.dtype).itemsize
    sub_align = {4: 8, 2: 16, 1: 32}.get(itemsize, 8)   # keep packed-dtype sublane alignment
    th = _pick_tile(h, div, sub_align, max_tile_h)
    tw = _pick_tile(w, div, 128, max_tile_w)
    grid = (n, h // th, w // tw, c)

    masked = mask is not None
    has_pool = scale > 1
    # weight[k] / numel(level k) folded into one compile-time scalar per level.
    level_scales = tuple(float(weights[k]) / float(n * c * (h >> k) * (w >> k))
                         for k in range(scale))

    data_spec = pl.BlockSpec((1, 1, th, tw), lambda b, i, j, ch: (b, ch, i, j))
    in_specs = [data_spec, data_spec]
    inputs = [x, y]
    if masked:
        mask = mask.reshape(n, 1, h, w)
        # Channel is the innermost grid axis and this index_map ignores it, so the mask
        # tile is DMA'd once per spatial tile and stays resident for all C channel steps.
        in_specs.append(pl.BlockSpec((1, 1, th, tw), lambda b, i, j, ch: (b, 0, i, j)))
        inputs.append(mask)
    if has_pool:
        ph_mat = _row_pool_matrix(th)
        pw_mat = _col_pool_matrix(tw)
        # Constant index_map: pooling matrices are DMA'd once and stay resident in VMEM.
        in_specs.append(pl.BlockSpec(ph_mat.shape, lambda b, i, j, ch: (0, 0)))
        in_specs.append(pl.BlockSpec(pw_mat.shape, lambda b, i, j, ch: (0, 0)))
        inputs += [ph_mat, pw_mat]

    # Per-(n, row-tile) partial sums, lane-dense 128-wide so stores stay unmasked vst.
    out_spec = pl.BlockSpec((1, 1, 1, 128), lambda b, i, j, ch: (b, i, 0, 0))
    out_shape = jax.ShapeDtypeStruct((n, h // th, 1, 128), jnp.float32)

    scratch_shapes = []
    if masked and has_pool:
        scratch_shapes = [
            pltpu.VMEM((_pad_dim(th, k, 8), _pad_dim(tw, k, 128)), jnp.float32)
            for k in range(1, scale)
        ]

    # Advisory cost estimate: this is a memory-bound custom call.
    bytes_accessed = (x.size + y.size) * itemsize + n * (h // th) * 128 * 4
    if masked:
        bytes_accessed += mask.size * jnp.dtype(mask.dtype).itemsize
    flops = 0
    for k in range(scale):
        flops += (3 if masked else 2) * n * c * (h >> k) * (w >> k)
    if has_pool:
        bytes_accessed += (ph_mat.size + pw_mat.size) * 4
        n_tiles = n * c * (h // th) * (w // tw)
        for k in range(1, scale):
            h0, w0 = _pad_dim(th, k - 1, 8), _pad_dim(tw, k - 1, 128)
            h1, w1 = _pad_dim(th, k, 8), _pad_dim(tw, k, 128)
            flops += n_tiles * 2 * h1 * h0 * w0   # row-pool matmul
            flops += n_tiles * 2 * h1 * w0 * w1   # column-pool matmul

    partials = pl.pallas_call(
        _make_kernel(level_scales, th, tw, masked),
        grid=grid,
        in_specs=in_specs,
        out_specs=out_spec,
        out_shape=out_shape,
        scratch_shapes=scratch_shapes,
        compiler_params=pltpu.CompilerParams(
            dimension_semantics=("parallel", "parallel", "arbitrary", "arbitrary"),
            vmem_limit_bytes=32 * 1024 * 1024),
        cost_estimate=pl.CostEstimate(flops=int(flops), transcendentals=0,
                                      bytes_accessed=int(bytes_accessed)),
    )(*inputs)

    # Each (n, row-tile) row holds that slice's weighted partial, broadcast over 128 lanes.
    return jnp.sum(partials[:, :, 0, 0])


# ---------------------------------------------------------------------------
# Pure-JAX reference (verification only)
# ---------------------------------------------------------------------------
def _ref_avgpool2(t):
    b, ch, h, w = t.shape
    ho, wo = h // 2, w // 2
    t = t[:, :, : 2 * ho, : 2 * wo].reshape(b, ch, ho, 2, wo, 2)
    return t.mean(axis=(3, 5))


def _ref_loss(x, y, mask=None, scale=5):
    weights = _WEIGHTS[:scale]
    if mask is not None:
        mask = jnp.broadcast_to(mask, x.shape)
    loss = jnp.float32(0.0)
    for i, wgt in enumerate(weights):
        if mask is not None:
            loss = loss + wgt * jnp.mean(jnp.abs(x * mask - y * mask))
        else:
            loss = loss + wgt * jnp.mean(jnp.abs(x - y))
        if i != len(weights) - 1:
            x = _ref_avgpool2(x)
            y = _ref_avgpool2(y)
            if mask is not None:
                mask = _ref_avgpool2(mask)
    return loss


if __name__ == "__main__":
    key = jax.random.PRNGKey(0)
    kx, ky, km = jax.random.split(key, 3)
    N, C, H, W = 2, 4, 16, 16
    x = jax.random.normal(kx, (N, C, H, W), dtype=jnp.float32)
    y = jax.random.normal(ky, (N, C, H, W), dtype=jnp.float32)
    mask = (jax.random.uniform(km, (N, 1, H, W)) > 0.5).astype(jnp.float32)

    # Tolerance allows for MXU pooling pass precision while still catching semantic bugs.
    RTOL, ATOL = 1e-3, 1e-5

    # Unmasked path (single-tile grid).
    out = jax.block_until_ready(multiscale_pixel_loss(x, y, mask=None, scale=5))
    ref = _ref_loss(x, y, mask=None, scale=5)
    np.testing.assert_allclose(np.asarray(out), np.asarray(ref), rtol=RTOL, atol=ATOL)

    # Masked path (single-tile grid, mask resident across channels).
    out_m = jax.block_until_ready(multiscale_pixel_loss(x, y, mask=mask, scale=5))
    ref_m = _ref_loss(x, y, mask=mask, scale=5)
    np.testing.assert_allclose(np.asarray(out_m), np.asarray(ref_m), rtol=RTOL, atol=ATOL)

    # Multi-tile / multi-channel grid: exercises the pl.when accumulator init, the
    # revisited per-(n, row-tile) output block, and mask-pyramid scratch reuse across C.
    N2, C2, H2, W2 = 2, 3, 64, 256
    kx2, ky2, km2 = jax.random.split(jax.random.PRNGKey(1), 3)
    x2 = jax.random.normal(kx2, (N2, C2, H2, W2), dtype=jnp.float32)
    y2 = jax.random.normal(ky2, (N2, C2, H2, W2), dtype=jnp.float32)
    m2 = (jax.random.uniform(km2, (N2, 1, H2, W2)) > 0.5).astype(jnp.float32)
    out2 = jax.block_until_ready(
        multiscale_pixel_loss(x2, y2, mask=m2, scale=5, max_tile_h=32, max_tile_w=128))
    ref2 = _ref_loss(x2, y2, mask=m2, scale=5)
    np.testing.assert_allclose(np.asarray(out2), np.asarray(ref2), rtol=RTOL, atol=ATOL)

    print("KERNEL_OK")
</pallas_src>

<mosaic_0001>
module attributes {stable_mosaic.version = 11 : i64} {
  func.func @kernel(%arg0: i32, %arg1: i32, %arg2: i32, %arg3: i32, %arg4: memref<1x1x16x16xf32, #tpu.memory_space<vmem>>, %arg5: memref<1x1x16x16xf32, #tpu.memory_space<vmem>>, %arg6: memref<8x16xf32, #tpu.memory_space<vmem>>, %arg7: memref<16x16xf32, #tpu.memory_space<vmem>>, %arg8: memref<1x1x1x128xf32, #tpu.memory_space<vmem>>) attributes {dimension_semantics = [#tpu.dimension_semantics<parallel>, #tpu.dimension_semantics<parallel>, #tpu.dimension_semantics<arbitrary>, #tpu.dimension_semantics<arbitrary>], iteration_bounds = array<i64: 2, 1, 1, 4>, scalar_prefetch = 0 : i64, scratch_operands = 0 : i64, tpu.core_type = #tpu.core_type<tc>, window_params = [{transform_indices = @transform_0, window_bounds = array<i64: 1, 1, 16, 16>}, {transform_indices = @transform_1, window_bounds = array<i64: 1, 1, 16, 16>}, {pipeline_mode = #tpu.pipeline_mode<synchronous>, transform_indices = @transform_2, window_bounds = array<i64: 8, 16>}, {pipeline_mode = #tpu.pipeline_mode<synchronous>, transform_indices = @transform_3, window_bounds = array<i64: 16, 16>}, {transform_indices = @transform_4, window_bounds = array<i64: 1, 1, 1, 128>}]} {
    %c0_i32 = arith.constant 0 : i32
    %0 = arith.cmpi eq, %arg2, %c0_i32 : i32
    %c0_i32_0 = arith.constant 0 : i32
    %1 = arith.cmpi eq, %arg3, %c0_i32_0 : i32
    %2 = arith.andi %0, %1 : i1
    %3 = arith.extui %2 : i1 to i32
    %c0_i32_1 = arith.constant 0 : i32
    %4 = arith.cmpi ne, %3, %c0_i32_1 : i32
    scf.if %4 {
      %cst_50 = arith.constant 0.000000e+00 : f32
      %64 = vector.broadcast %cst_50 : f32 to vector<1x1x1x128xf32>
      %c0_51 = arith.constant 0 : index
      %c0_52 = arith.constant 0 : index
      %c0_53 = arith.constant 0 : index
      %c0_54 = arith.constant 0 : index
      %65 = vector.load %arg8[%c0_51, %c0_52, %c0_53, %c0_54] : memref<1x1x1x128xf32, #tpu.memory_space<vmem>>, vector<1x1x1x128xf32>
      tpu.vector_store %arg8[%c0_51, %c0_52, %c0_53, %c0_54], %64 {strides = array<i32>} : memref<1x1x1x128xf32, #tpu.memory_space<vmem>>, vector<1x1x1x128xf32>,
    } else {
    }
    %c0 = arith.constant 0 : index
    %c0_2 = arith.constant 0 : index
    %c0_3 = arith.constant 0 : index
    %c0_4 = arith.constant 0 : index
    %5 = vector.load %arg4[%c0, %c0_2, %c0_3, %c0_4] : memref<1x1x16x16xf32, #tpu.memory_space<vmem>>, vector<1x1x16x16xf32>
    %6 = vector.shape_cast %5 : vector<1x1x16x16xf32> to vector<16x16xf32>
    %c0_5 = arith.constant 0 : index
    %c0_6 = arith.constant 0 : index
    %c0_7 = arith.constant 0 : index
    %c0_8 = arith.constant 0 : index
    %7 = vector.load %arg5[%c0_5, %c0_6, %c0_7, %c0_8] : memref<1x1x16x16xf32, #tpu.memory_space<vmem>>, vector<1x1x16x16xf32>
    %8 = vector.shape_cast %7 : vector<1x1x16x16xf32> to vector<16x16xf32>
    %9 = arith.subf %6, %8 : vector<16x16xf32>
    %10 = math.absf %9 : vector<16x16xf32>
    %11 = vector.shape_cast %10 : vector<16x16xf32> to vector<1x16x16xf32>
    %cst = arith.constant dense<0.000000e+00> : vector<1xf32>
    %12 = vector.multi_reduction <add>, %11, %cst [1, 2] : vector<1x16x16xf32> to vector<1xf32>
    %13 = vector.shape_cast %12 : vector<1xf32> to vector<1x1x1xf32>
    %14 = vector.extract %13[0, 0, 0] : f32 from vector<1x1x1xf32>
    %cst_9 = arith.constant 4.8828125E-4 : f32
    %15 = arith.mulf %cst_9, %14 : f32
    %c0_10 = arith.constant 0 : index
    %c0_11 = arith.constant 0 : index
    %16 = vector.load %arg6[%c0_10, %c0_11] : memref<8x16xf32, #tpu.memory_space<vmem>>, vector<8x16xf32>
    %c0_12 = arith.constant 0 : index
    %c0_13 = arith.constant 0 : index
    %17 = vector.load %arg7[%c0_12, %c0_13] : memref<16x16xf32, #tpu.memory_space<vmem>>, vector<16x16xf32>
    %cst_14 = arith.constant dense<0.000000e+00> : vector<8x16xf32>
    %18 = tpu.matmul %16, %9, %cst_14 {dimension_numbers = #tpu.dot_dimension_numbers<[1], [0], [0], [1], [0, 0, 1, 1], [], []>} : vector<8x16xf32>, vector<16x16xf32>, vector<8x16xf32> -> vector<8x16xf32>
    %cst_15 = arith.constant dense<0.000000e+00> : vector<8x16xf32>
    %19 = tpu.matmul %18, %17, %cst_15 {dimension_numbers = #tpu.dot_dimension_numbers<[1], [0], [0], [1], [0, 0, 1, 1], [], []>} : vector<8x16xf32>, vector<16x16xf32>, vector<8x16xf32> -> vector<8x16xf32>
    %20 = math.absf %19 : vector<8x16xf32>
    %21 = vector.shape_cast %20 : vector<8x16xf32> to vector<1x8x16xf32>
    %cst_16 = arith.constant dense<0.000000e+00> : vector<1xf32>
    %22 = vector.multi_reduction <add>, %21, %cst_16 [1, 2] : vector<1x8x16xf32> to vector<1xf32>
    %23 = vector.shape_cast %22 : vector<1xf32> to vector<1x1x1xf32>
    %24 = vector.extract %23[0, 0, 0] : f32 from vector<1x1x1xf32>
    %cst_17 = arith.constant 9.765625E-4 : f32
    %25 = arith.mulf %cst_17, %24 : f32
    %26 = arith.addf %15, %25 : f32
    %c0_18 = arith.constant 0 : index
    %c0_19 = arith.constant 0 : index
    %27 = vector.load %arg6[%c0_18, %c0_19] : memref<8x16xf32, #tpu.memory_space<vmem>>, vector<8x8xf32>
    %c0_20 = arith.constant 0 : index
    %c0_21 = arith.constant 0 : index
    %28 = vector.load %arg7[%c0_20, %c0_21] : memref<16x16xf32, #tpu.memory_space<vmem>>, vector<16x16xf32>
    %cst_22 = arith.constant dense<0.000000e+00> : vector<8x16xf32>
    %29 = tpu.matmul %27, %19, %cst_22 {dimension_numbers = #tpu.dot_dimension_numbers<[1], [0], [0], [1], [0, 0, 1, 1], [], []>} : vector<8x8xf32>, vector<8x16xf32>, vector<8x16xf32> -> vector<8x16xf32>
    %cst_23 = arith.constant dense<0.000000e+00> : vector<8x16xf32>
    %30 = tpu.matmul %29, %28, %cst_23 {dimension_numbers = #tpu.dot_dimension_numbers<[1], [0], [0], [1], [0, 0, 1, 1], [], []>} : vector<8x16xf32>, vector<16x16xf32>, vector<8x16xf32> -> vector<8x16xf32>
    %31 = math.absf %30 : vector<8x16xf32>
    %32 = vector.shape_cast %31 : vector<8x16xf32> to vector<1x8x16xf32>
    %cst_24 = arith.constant dense<0.000000e+00> : vector<1xf32>
    %33 = vector.multi_reduction <add>, %32, %cst_24 [1, 2] : vector<1x8x16xf32> to vector<1xf32>
    %34 = vector.shape_cast %33 : vector<1xf32> to vector<1x1x1xf32>
    %35 = vector.extract %34[0, 0, 0] : f32 from vector<1x1x1xf32>
    %cst_25 = arith.constant 0.001953125 : f32
    %36 = arith.mulf %cst_25, %35 : f32
    %37 = arith.addf %26, %36 : f32
    %c0_26 = arith.constant 0 : index
    %c0_27 = arith.constant 0 : index
    %38 = vector.load %arg6[%c0_26, %c0_27] : memref<8x16xf32, #tpu.memory_space<vmem>>, vector<8x8xf32>
    %c0_28 = arith.constant 0 : index
    %c0_29 = arith.constant 0 : index
    %39 = vector.load %arg7[%c0_28, %c0_29] : memref<16x16xf32, #tpu.memory_space<vmem>>, vector<16x16xf32>
    %cst_30 = arith.constant dense<0.000000e+00> : vector<8x16xf32>
    %40 = tpu.matmul %38, %30, %cst_30 {dimension_numbers = #tpu.dot_dimension_numbers<[1], [0], [0], [1], [0, 0, 1, 1], [], []>} : vector<8x8xf32>, vector<8x16xf32>, vector<8x16xf32> -> vector<8x16xf32>
    %cst_31 = arith.constant dense<0.000000e+00> : vector<8x16xf32>
    %41 = tpu.matmul %40, %39, %cst_31 {dimension_numbers = #tpu.dot_dimension_numbers<[1], [0], [0], [1], [0, 0, 1, 1], [], []>} : vector<8x16xf32>, vector<16x16xf32>, vector<8x16xf32> -> vector<8x16xf32>
    %42 = math.absf %41 : vector<8x16xf32>
    %43 = vector.shape_cast %42 : vector<8x16xf32> to vector<1x8x16xf32>
    %cst_32 = arith.constant dense<0.000000e+00> : vector<1xf32>
    %44 = vector.multi_reduction <add>, %43, %cst_32 [1, 2] : vector<1x8x16xf32> to vector<1xf32>
    %45 = vector.shape_cast %44 : vector<1xf32> to vector<1x1x1xf32>
    %46 = vector.extract %45[0, 0, 0] : f32 from vector<1x1x1xf32>
    %cst_33 = arith.constant 3.906250e-03 : f32
    %47 = arith.mulf %cst_33, %46 : f32
    %48 = arith.addf %37, %47 : f32
    %c0_34 = arith.constant 0 : index
    %c0_35 = arith.constant 0 : index
    %49 = vector.load %arg6[%c0_34, %c0_35] : memref<8x16xf32, #tpu.memory_space<vmem>>, vector<8x8xf32>
    %c0_36 = arith.constant 0 : index
    %c0_37 = arith.constant 0 : index
    %50 = vector.load %arg7[%c0_36, %c0_37] : memref<16x16xf32, #tpu.memory_space<vmem>>, vector<16x16xf32>
    %cst_38 = arith.constant dense<0.000000e+00> : vector<8x16xf32>
    %51 = tpu.matmul %49, %41, %cst_38 {dimension_numbers = #tpu.dot_dimension_numbers<[1], [0], [0], [1], [0, 0, 1, 1], [], []>} : vector<8x8xf32>, vector<8x16xf32>, vector<8x16xf32> -> vector<8x16xf32>
    %cst_39 = arith.constant dense<0.000000e+00> : vector<8x16xf32>
    %52 = tpu.matmul %51, %50, %cst_39 {dimension_numbers = #tpu.dot_dimension_numbers<[1], [0], [0], [1], [0, 0, 1, 1], [], []>} : vector<8x16xf32>, vector<16x16xf32>, vector<8x16xf32> -> vector<8x16xf32>
    %53 = math.absf %52 : vector<8x16xf32>
    %54 = vector.shape_cast %53 : vector<8x16xf32> to vector<1x8x16xf32>
    %cst_40 = arith.constant dense<0.000000e+00> : vector<1xf32>
    %55 = vector.multi_reduction <add>, %54, %cst_40 [1, 2] : vector<1x8x16xf32> to vector<1xf32>
    %56 = vector.shape_cast %55 : vector<1xf32> to vector<1x1x1xf32>
    %57 = vector.extract %56[0, 0, 0] : f32 from vector<1x1x1xf32>
    %cst_41 = arith.constant 1.562500e-02 : f32
    %58 = arith.mulf %cst_41, %57 : f32
    %59 = arith.addf %48, %58 : f32
    %c0_42 = arith.constant 0 : index
    %c0_43 = arith.constant 0 : index
    %c0_44 = arith.constant 0 : index
    %c0_45 = arith.constant 0 : index
    %60 = vector.load %arg8[%c0_42, %c0_43, %c0_44, %c0_45] : memref<1x1x1x128xf32, #tpu.memory_space<vmem>>, vector<1x1x1x128xf32>
    %61 = vector.broadcast %59 : f32 to vector<1x1x1x128xf32>
    %62 = arith.addf %60, %61 : vector<1x1x1x128xf32>
    %c0_46 = arith.constant 0 : index
    %c0_47 = arith.constant 0 : index
    %c0_48 = arith.constant 0 : index
    %c0_49 = arith.constant 0 : index
    %63 = vector.load %arg8[%c0_46, %c0_47, %c0_48, %c0_49] : memref<1x1x1x128xf32, #tpu.memory_space<vmem>>, vector<1x1x1x128xf32>
    tpu.vector_store %arg8[%c0_46, %c0_47, %c0_48, %c0_49], %62 {strides = array<i32>} : memref<1x1x1x128xf32, #tpu.memory_space<vmem>>, vector<1x1x1x128xf32>,
    return
  }
  func.func @transform_0(%arg0: i32, %arg1: i32, %arg2: i32, %arg3: i32) -> (i32, i32, i32, i32) {
    %c0_i32 = arith.constant 0 : i32
    return %arg0, %arg3, %arg1, %arg2 : i32, i32, i32, i32
  }
  func.func @transform_1(%arg0: i32, %arg1: i32, %arg2: i32, %arg3: i32) -> (i32, i32, i32, i32) {
    %c0_i32 = arith.constant 0 : i32
    return %arg0, %arg3, %arg1, %arg2 : i32, i32, i32, i32
  }
  func.func @transform_2(%arg0: i32, %arg1: i32, %arg2: i32, %arg3: i32) -> (i32, i32) {
    %c0_i32 = arith.constant 0 : i32
    %c0_i32_0 = arith.constant 0 : i32
    %c0_i32_1 = arith.constant 0 : i32
    return %c0_i32, %c0_i32_0 : i32, i32
  }
  func.func @transform_3(%arg0: i32, %arg1: i32, %arg2: i32, %arg3: i32) -> (i32, i32) {
    %c0_i32 = arith.constant 0 : i32
    %c0_i32_0 = arith.constant 0 : i32
    %c0_i32_1 = arith.constant 0 : i32
    return %c0_i32, %c0_i32_0 : i32, i32
  }
  func.func @transform_4(%arg0: i32, %arg1: i32, %arg2: i32, %arg3: i32) -> (i32, i32, i32, i32) {
    %c0_i32 = arith.constant 0 : i32
    %c0_i32_0 = arith.constant 0 : i32
    %c0_i32_1 = arith.constant 0 : i32
    return %arg0, %arg1, %c0_i32, %c0_i32_0 : i32, i32, i32, i32
  }
}

</mosaic_0001>

<llo_original>
// kernel: tpu_custom_call.1
$region0: #{tpu_custom_call.1}
  #allocation0 [shape = 'u32[]', space=smem, size = 0x4, offset = 0x4, fixed_abs, tag = 'smem constant byte address 0x4 - core index']
  #allocation1 [shape = 'u32[72,128]{1,0:T(1,128)}', space=vmem, size = 0x9000, scoped, tag = 'internal scratch']
  %s0 = inlined_call_operand.hbm [shape: f32[2,4,16,16], index: 0, kind: input, shape index: {}]
  %s1 = inlined_call_operand.hbm [shape: f32[2,4,16,16], index: 1, kind: input, shape index: {}]
  %s2 = inlined_call_operand.hbm [shape: f32[8,16], index: 2, kind: input, shape index: {}]
  %s3 = inlined_call_operand.hbm [shape: f32[16,16], index: 3, kind: input, shape index: {}]
  %s4 = inlined_call_operand.hbm [shape: f32[2,1,1,128], index: 4, kind: output, shape index: {}]
  %s5 = sld [smem:[#allocation0]]
  $region69: #{tpu_custom_call.1} parent=0
    _
  %s7 = ssub.s32 1, %s5
  %s8 = scalar_select 0, %s7, %s5
  $region1: #{tpu_custom_call.1} parent=0
    #allocation2 [shape = 'u8[16384]{0}', space=vmem, size = 0x4000, scoped, tag = 'input window, operand 0']
    #allocation3 [shape = 's32[2]{0}', space=sflag, size = 0x8, scoped, tag = 'scoped memory for tpu_custom_call.1']
    #allocation4 [shape = 's32[2]{0}', space=sflag, size = 0x8, scoped, tag = 'scoped memory for tpu_custom_call.1']
    #allocation5 [shape = 'u8[16384]{0}', space=vmem, size = 0x4000, scoped, tag = 'input window, operand 1']
    #allocation6 [shape = 's32[2]{0}', space=sflag, size = 0x8, scoped, tag = 'scoped memory for tpu_custom_call.1']
    #allocation7 [shape = 'u8[4096]{0}', space=vmem, size = 0x1000, scoped, tag = 'input window, operand 2, single buffered']
    #allocation8 [shape = 'u8[8192]{0}', space=vmem, size = 0x2000, scoped, tag = 'input window, operand 3, single buffered']
    #allocation9 [shape = 's32[1]{0}', space=sflag, size = 0x4, scoped, tag = 'scoped memory for tpu_custom_call.1']
    #allocation10 [shape = 'u8[1024]{0}', space=vmem, size = 0x400, scoped, tag = 'output window, operand 0']
    %9 = vsyncpa [#allocation3], 0
    %s10 = scalar_lea.sflag [#allocation3], 1
    %11 = vsyncpa %s10, 0
    %12 = vsyncpa [#allocation6], 0
    %s13 = scalar_lea.sflag [#allocation6], 1
    %14 = vsyncpa %s13, 0
    %15 = vsyncpa [#allocation9], 0
    %16 = vsyncpa [#allocation4], 0
    %s17 = scalar_lea.sflag [#allocation4], 1
    %18 = vsyncpa %s17, 0
    loop: start=0, step=1, limit=10
    $region2: #{tpu_custom_call.1} parent=1 // loop_pre_header
      _
    $region3: #{tpu_custom_call.1} parent=1 // loop_header
      %s20 = sphi 0, %s24
      %p21 = scmp.ge.s32.totalorder %s20, 10
      %s27 = sphi 0, %s53
      %s28 = sphi 0, %s49
      %s29 = sphi 0, %s45
      %s30 = sphi 0, %s41
      %s31 = sphi 0, %s27
      %s32 = sphi 0, %s28
      %s33 = sphi 0, %s29
      %s34 = sphi 0, %s30
      %s35 = sphi 0, %s31
      %s36 = sphi 0, %s32
      %s37 = sphi 0, %s33
      %s38 = sphi 0, %s34
      %s62 = sphi 0, %s64
      %s65 = sphi 0, %s62
      %s66 = sphi 0, %s65
      %s82 = sphi 0, %s66
      %s94 = sphi 0, %s96
      %s97 = sphi 0, %s94
      %s98 = sphi 0, %s97
      %s114 = sphi 0, %s98
      %s118 = sphi 0, %s118
      %s120 = sphi 0, %s118
      %s121 = sphi 0, %s120
      %s135 = sphi 0, %s121
      %s139 = sphi 0, %s139
      %s141 = sphi 0, %s139
      %s142 = sphi 0, %s141
      %s156 = sphi 0, %s142
      %s164 = sphi 0, %s166
      %s167 = sphi 0, %s164
      %s168 = sphi 0, %s167
      %s184 = sphi 0, %s168
    $region4: #{tpu_custom_call.1} parent=1 // loop_header_branch
      %23 = sbr.rel (%p21) target = $region8
    $region5: #{tpu_custom_call.1} parent=1 // loop_body
      %s25 = ssub.s32 %s20, 1
      %s26 = ssub.s32 %s20, 2
      %s39 = sadd.s32 1, %s30
      %p40 = scmp.ge.s32.totalorder %s39, 4
      %s41 = scalar_select %p40, 0, %s39
      %s42 = sadd.s32 1, %s29
      %s43 = scalar_select %p40, %s42, %s29
      %p44 = scmp.ge.s32.totalorder %s43, 1
      %s45 = scalar_select %p44, 0, %s43
      %s46 = sadd.s32 1, %s28
      %s47 = scalar_select %p44, %s46, %s28
      %p48 = scmp.ge.s32.totalorder %s47, 1
      %s49 = scalar_select %p48, 0, %s47
      %s50 = sadd.s32 1, %s27
      %s51 = scalar_select %p48, %s50, %s27
      %p52 = scmp.ge.s32.totalorder %s51, 2
      %s53 = scalar_select %p52, 0, %s51
      %s54 = ssub.s32 %s27, %s53
      %s55 = ssub.s32 %s30, %s41
      %s56 = sor.u32 %s54, %s55
      %s57 = ssub.s32 %s28, %s49
      %s58 = sor.u32 %s56, %s57
      %s59 = ssub.s32 %s29, %s45
      %s60 = sor.u32 %s58, %s59
      %p61 = scmp.eq.s32.totalorder %s60, 0
      %s63 = sadd.s32 %s62, 1
      %s64 = scalar_select %p61, %s62, %s63
      %p67 = pneg %p61
      %p68 = scmp.eq.s32.totalorder %s20, 7
      %p69 = por %p67, %p68
      %p70 = scmp.ne.s32.totalorder %s62, %s65
      %p71 = scmp.eq.s32.totalorder %s20, 0
      %p72 = por %p70, %p71
      %p73 = scmp.ne.s32.totalorder %s62, %s65
      %p74 = scmp.eq.s32.totalorder %s25, 7
      %p75 = por %p73, %p74
      %p76 = scmp.ne.s32.totalorder %s65, %s66
      %p77 = scmp.eq.s32.totalorder %s25, 0
      %p78 = por %p76, %p77
      %p79 = scmp.ne.s32.totalorder %s65, %s66
      %p80 = scmp.eq.s32.totalorder %s26, 7
      %p81 = por %p79, %p80
      %p83 = scmp.ne.s32.totalorder %s66, %s82
      %p84 = scmp.eq.s32.totalorder %s26, 0
      %p85 = por %p83, %p84
      %s86 = ssub.s32 %s27, %s53
      %s87 = ssub.s32 %s30, %s41
      %s88 = sor.u32 %s86, %s87
      %s89 = ssub.s32 %s28, %s49
      %s90 = sor.u32 %s88, %s89
      %s91 = ssub.s32 %s29, %s45
      %s92 = sor.u32 %s90, %s91
      %p93 = scmp.eq.s32.totalorder %s92, 0
      %s95 = sadd.s32 %s94, 1
      %s96 = scalar_select %p93, %s94, %s95
      %p99 = pneg %p93
      %p100 = scmp.eq.s32.totalorder %s20, 7
      %p101 = por %p99, %p100
      %p102 = scmp.ne.s32.totalorder %s94, %s97
      %p103 = scmp.eq.s32.totalorder %s20, 0
      %p104 = por %p102, %p103
      %p105 = scmp.ne.s32.totalorder %s94, %s97
      %p106 = scmp.eq.s32.totalorder %s25, 7
      %p107 = por %p105, %p106
      %p108 = scmp.ne.s32.totalorder %s97, %s98
      %p109 = scmp.eq.s32.totalorder %s25, 0
      %p110 = por %p108, %p109
      %p111 = scmp.ne.s32.totalorder %s97, %s98
      %p112 = scmp.eq.s32.totalorder %s26, 7
      %p113 = por %p111, %p112
      %p115 = scmp.ne.s32.totalorder %s98, %s114
      %p116 = scmp.eq.s32.totalorder %s26, 0
      %p117 = por %p115, %p116
      %s119 = sadd.s32 %s118, 1
      %p122 = scmp.eq.s32.totalorder %s20, 7
      %p123 = scmp.ne.s32.totalorder %s118, %s120
      %p124 = scmp.eq.s32.totalorder %s20, 0
      %p125 = por %p123, %p124
      %p126 = scmp.ne.s32.totalorder %s118, %s120
      %p127 = scmp.eq.s32.totalorder %s25, 7
      %p128 = por %p126, %p127
      %p129 = scmp.ne.s32.totalorder %s120, %s121
      %p130 = scmp.eq.s32.totalorder %s25, 0
      %p131 = por %p129, %p130
      %p132 = scmp.ne.s32.totalorder %s120, %s121
      %p133 = scmp.eq.s32.totalorder %s26, 7
      %p134 = por %p132, %p133
      %p136 = scmp.ne.s32.totalorder %s121, %s135
      %p137 = scmp.eq.s32.totalorder %s26, 0
      %p138 = por %p136, %p137
      %s140 = sadd.s32 %s139, 1
      %p143 = scmp.eq.s32.totalorder %s20, 7
      %p144 = scmp.ne.s32.totalorder %s139, %s141
      %p145 = scmp.eq.s32.totalorder %s20, 0
      %p146 = por %p144, %p145
      %p147 = scmp.ne.s32.totalorder %s139, %s141
      %p148 = scmp.eq.s32.totalorder %s25, 7
      %p149 = por %p147, %p148
      %p150 = scmp.ne.s32.totalorder %s141, %s142
      %p151 = scmp.eq.s32.totalorder %s25, 0
      %p152 = por %p150, %p151
      %p153 = scmp.ne.s32.totalorder %s141, %s142
      %p154 = scmp.eq.s32.totalorder %s26, 7
      %p155 = por %p153, %p154
      %p157 = scmp.ne.s32.totalorder %s142, %s156
      %p158 = scmp.eq.s32.totalorder %s26, 0
      %p159 = por %p157, %p158
      %s160 = ssub.s32 %s27, %s53
      %s161 = ssub.s32 %s28, %s49
      %s162 = sor.u32 %s160, %s161
      %p163 = scmp.eq.s32.totalorder %s162, 0
      %s165 = sadd.s32 %s164, 1
      %s166 = scalar_select %p163, %s164, %s165
      %p169 = pneg %p163
      %p170 = scmp.eq.s32.totalorder %s20, 7
      %p171 = por %p169, %p170
      %p172 = scmp.ne.s32.totalorder %s164, %s167
      %p173 = scmp.eq.s32.totalorder %s20, 0
      %p174 = por %p172, %p173
      %p175 = scmp.ne.s32.totalorder %s164, %s167
      %p176 = scmp.eq.s32.totalorder %s25, 7
      %p177 = por %p175, %p176
      %p178 = scmp.ne.s32.totalorder %s167, %s168
      %p179 = scmp.eq.s32.totalorder %s25, 0
      %p180 = por %p178, %p179
      %p181 = scmp.ne.s32.totalorder %s167, %s168
      %p182 = scmp.eq.s32.totalorder %s26, 7
      %p183 = por %p181, %p182
      %p185 = scmp.ne.s32.totalorder %s168, %s184
      %p186 = scmp.eq.s32.totalorder %s26, 0
      %p187 = por %p185, %p186
      %p188 = scmp.le.s32.totalorder 1, %s20
      %p189 = scmp.lt.s32.totalorder %s20, 9
      %p190 = pnand %p188, %p189
      %p191 = pneg %p190
      // Predicated region
      $region9: #{tpu_custom_call.1} parent=5 // pred_check
        _
      $region10: #{tpu_custom_call.1} parent=5 // pred_check_branch
        %193 = sbr.rel (%p190) target = $region12
      $region11: #{tpu_custom_call.1} parent=5 // pred_region
        %s194 = ssub.s32 %s20, 1
        // Predicated region
        $region13: #{tpu_custom_call.1} parent=11 // pred_check
          %p195 = pneg %p131
        $region14: #{tpu_custom_call.1} parent=11 // pred_check_branch
          %197 = sbr.rel (%p195) target = $region16
        $region15: #{tpu_custom_call.1} parent=11 // pred_region
          %199 = vsyncadd [#allocation6], 0
          %s201 = sshll.u32 %s2, 4
          %s202 = int_to_ptr.hbm [resolvable:$true] %s201
          %s203 = sshll.u32 [#allocation7], 4
          %s204 = int_to_ptr.vmem [resolvable:$true] %s203
          %206 = dma.hbm_to_vmem [thread:$0]  %s202, 128, %s204, [#allocation6]
        $region16: #{tpu_custom_call.1} parent=11 // pred_fallthru
          _
        // Predicated region
        $region17: #{tpu_custom_call.1} parent=11 // pred_check
          %p207 = pneg %p152
        $region18: #{tpu_custom_call.1} parent=11 // pred_check_branch
          %209 = sbr.rel (%p207) target = $region20
        $region19: #{tpu_custom_call.1} parent=11 // pred_region
          %211 = vsyncadd [#allocation9], 0
          %s212 = sshll.u32 %s3, 4
          %s213 = int_to_ptr.hbm [resolvable:$true] %s212
          %s214 = sshll.u32 [#allocation8], 4
          %s215 = int_to_ptr.vmem [resolvable:$true] %s214
          %220 = dma.hbm_to_vmem [thread:$0]  %s213, 256, %s215, [#allocation9], 128, 128, 8
        $region20: #{tpu_custom_call.1} parent=11 // pred_fallthru
          _
      $region12: #{tpu_custom_call.1} parent=5 // pred_fallthru
        _
      %p221 = scmp.lt.s32.totalorder %s20, 8
      // Predicated region
      $region21: #{tpu_custom_call.1} parent=5 // pred_check
        %p222 = pneg %p221
      $region22: #{tpu_custom_call.1} parent=5 // pred_check_branch
        %224 = sbr.rel (%p222) target = $region24
      $region23: #{tpu_custom_call.1} parent=5 // pred_region
        // Predicated region
        $region25: #{tpu_custom_call.1} parent=23 // pred_check
          %p225 = pneg %p72
        $region26: #{tpu_custom_call.1} parent=23 // pred_check_branch
          %227 = sbr.rel (%p225) target = $region28
        $region27: #{tpu_custom_call.1} parent=23 // pred_region
          %s228 = sand.u32 %s62, 1
          %s229 = scalar_lea.sflag [#allocation3], %s228
          %s230 = sand.u32 %s62, 1
          %s231 = smul.addr %s230, 16
          %s232 = scalar_lea.vmem [#allocation2], %s231
          %s233 = smul.u32 2, %s28
          %235 = vsyncadd %s229, 0
          %s236 = sadd.s32 %s29, %s233
          %s237 = smul.addr %s30, 2
          %s238 = sadd.s32 %s236, %s237
          %s239 = smul.addr %s27, 8
          %s240 = sadd.s32 %s238, %s239
          %s241 = smul.addr %s240, 8
          %s242 = scalar_lea.hbm %s0, %s241
          %s243 = sshll.u32 %s242, 4
          %s244 = int_to_ptr.hbm [resolvable:$true] %s243
          %s245 = sshll.u32 %s232, 4
          %s246 = int_to_ptr.vmem [resolvable:$true] %s245
          %251 = dma.hbm_to_vmem [thread:$0]  %s244, 256, %s246, %s229, 128, 128, 8
        $region28: #{tpu_custom_call.1} parent=23 // pred_fallthru
          _
        // Predicated region
        $region29: #{tpu_custom_call.1} parent=23 // pred_check
          %p252 = pneg %p104
        $region30: #{tpu_custom_call.1} parent=23 // pred_check_branch
          %254 = sbr.rel (%p252) target = $region32
        $region31: #{tpu_custom_call.1} parent=23 // pred_region
          %s255 = sand.u32 %s20, 1
          %s256 = scalar_lea.sflag [#allocation6], %s255
          %s257 = sand.u32 %s94, 1
          %s258 = smul.addr %s257, 16
          %s259 = scalar_lea.vmem [#allocation5], %s258
          %s260 = smul.u32 2, %s28
          %262 = vsyncadd %s256, 0
          %s263 = sadd.s32 %s29, %s260
          %s264 = smul.addr %s30, 2
          %s265 = sadd.s32 %s263, %s264
          %s266 = smul.addr %s27, 8
          %s267 = sadd.s32 %s265, %s266
          %s268 = smul.addr %s267, 8
          %s269 = scalar_lea.hbm %s1, %s268
          %s270 = sshll.u32 %s269, 4
          %s271 = int_to_ptr.hbm [resolvable:$true] %s270
          %s272 = sshll.u32 %s259, 4
          %s273 = int_to_ptr.vmem [resolvable:$true] %s272
          %278 = dma.hbm_to_vmem [thread:$0]  %s271, 256, %s273, %s256, 128, 128, 8
        $region32: #{tpu_custom_call.1} parent=23 // pred_fallthru
          _
      $region24: #{tpu_custom_call.1} parent=5 // pred_fallthru
        _
      %p279 = scmp.le.s32.totalorder 1, %s20
      %p280 = scmp.lt.s32.totalorder %s20, 9
      %p281 = pnand %p279, %p280
      %p282 = pneg %p281
      // Predicated region
      $region33: #{tpu_custom_call.1} parent=5 // pred_check
        _
      $region34: #{tpu_custom_call.1} parent=5 // pred_check_branch
        %284 = sbr.rel (%p281) target = $region36
      $region35: #{tpu_custom_call.1} parent=5 // pred_region
        %s285 = ssub.s32 %s20, 1
        %s286 = sand.u32 %s65, 1
        %s287 = scalar_lea.sflag [#allocation3], %s286
        %s288 = sand.u32 %s65, 1
        %s289 = smul.addr %s288, 16
        %s290 = scalar_lea.vmem [#allocation2], %s289
        // Predicated region
        $region37: #{tpu_custom_call.1} parent=35 // pred_check
          %p291 = pneg %p78
        $region38: #{tpu_custom_call.1} parent=35 // pred_check_branch
          %293 = sbr.rel (%p291) target = $region40
        $region39: #{tpu_custom_call.1} parent=35 // pred_region
          %295 = dma.done %s287, 256
        $region40: #{tpu_custom_call.1} parent=35 // pred_fallthru
          _
        %s296 = sand.u32 %s25, 1
        %s297 = scalar_lea.sflag [#allocation6], %s296
        %s298 = sand.u32 %s97, 1
        %s299 = smul.addr %s298, 16
        %s300 = scalar_lea.vmem [#allocation5], %s299
        // Predicated region
        $region41: #{tpu_custom_call.1} parent=35 // pred_check
          %p301 = pneg %p110
        $region42: #{tpu_custom_call.1} parent=35 // pred_check_branch
          %303 = sbr.rel (%p301) target = $region44
        $region43: #{tpu_custom_call.1} parent=35 // pred_region
          %305 = dma.done %s297, 256
        $region44: #{tpu_custom_call.1} parent=35 // pred_fallthru
          _
        // Predicated region
        $region45: #{tpu_custom_call.1} parent=35 // pred_check
          %p306 = pneg %p131
        $region46: #{tpu_custom_call.1} parent=35 // pred_check_branch
          %308 = sbr.rel (%p306) target = $region48
        $region47: #{tpu_custom_call.1} parent=35 // pred_region
          %310 = dma.done [#allocation6], 128
        $region48: #{tpu_custom_call.1} parent=35 // pred_fallthru
          _
        // Predicated region
        $region49: #{tpu_custom_call.1} parent=35 // pred_check
          %p311 = pneg %p152
        $region50: #{tpu_custom_call.1} parent=35 // pred_check_branch
          %313 = sbr.rel (%p311) target = $region52
        $region51: #{tpu_custom_call.1} parent=35 // pred_region
          %315 = dma.done [#allocation9], 256
        $region52: #{tpu_custom_call.1} parent=35 // pred_fallthru
          _
        %s316 = sand.u32 %s65, 1
        %s317 = scalar_lea.sflag [#allocation3], %s316
        %s318 = sand.u32 %s65, 1
        %s319 = smul.addr %s318, 16
        %s320 = scalar_lea.vmem [#allocation2], %s319
        %p321 = pneg %p78
        %p322 = pneg %p75
        %s323 = sand.u32 %s25, 1
        %s324 = scalar_lea.sflag [#allocation6], %s323
        %s325 = sand.u32 %s97, 1
        %s326 = smul.addr %s325, 16
        %s327 = scalar_lea.vmem [#allocation5], %s326
        %p328 = pneg %p110
        %p329 = pneg %p107
        %p330 = pneg %p131
        %p331 = pneg %p128
        %p332 = pneg %p152
        %p333 = pneg %p149
        %p334 = pneg %p180
        %p335 = pneg %p177
        %s336 = sand.u32 %s167, 1
        %s337 = scalar_lea.sflag [#allocation4], %s336
        %s338 = sand.u32 %s167, 1
        %s339 = scalar_lea.vmem [#allocation10], %s338
        %s340 = smul.u32 2, %s32
        %s341 = smul.u32 2, %s32
        %p342 = scmp.eq.s32.totalorder %s33, 0
        %p343 = scmp.eq.s32.totalorder %s34, 0
        %p344 = pnand %p342, %p343
        %p345 = pneg %p344
        // Predicated region
        $region53: #{tpu_custom_call.1} parent=35 // pred_check
          _
        $region54: #{tpu_custom_call.1} parent=35 // pred_check_branch
          %347 = sbr.rel (%p344) target = $region56
        $region55: #{tpu_custom_call.1} parent=35 // pred_region
          %348 = vst [vmem:[%s339] sm:$0x1] 0.0
        $region56: #{tpu_custom_call.1} parent=35 // pred_fallthru
          _
        %v349 = vld [vmem:[%s290] sm:$0xff]
        %v350 = vld [vmem:[%s290 + $0x8] sm:$0xff]
        %v351 = vld [vmem:[%s300] sm:$0xff]
        %v352 = vld [vmem:[%s300 + $0x8] sm:$0xff]
        %v353 = vsub.f32 %v349, %v351
        %v354 = vsub.f32 %v350, %v352
        %v355 = vand.u32 2147483647, %v353
        %v356 = vand.u32 2147483647, %v354
        %vm357 = vcmask 130048
        %v358 = vsel %vm357, %v355, 0.0
        %v359 = vsel %vm357, %v356, 0.0
        %v360 = vadd.f32 %v358, %v359
        %361 = vadd.xlane.f32.xlu0 %v360
        %v362 = vpop.xlane.xlu0 %361
        %v363 = vrot.slane %v362, 4
        %v364 = vadd.f32 %v362, %v363
        %v365 = vrot.slane %v364, 2
        %v366 = vadd.f32 %v364, %v365
        %v367 = vrot.slane %v366, 1
        %v368 = vadd.f32 %v366, %v367
        %s369 = vtos %v368
        %s370 = smul.f32 %s369, 0.00048828125
        %v371 = vld [vmem:[#allocation7] sm:$0xff]
        %v372 = vld [vmem:[#allocation8] sm:$0xff]
        %v373 = vld [vmem:[#allocation8 + $0x8] sm:$0xff]
        %v375 = vsel %vm357, %v371, 0
        %377 = vmatpush.msra.mxu0 0.0
        %378 = vmatpush.msra.mxu0 0.0
        %379 = vmatpush.msra.mxu0 0.0
        %380 = vmatpush.msra.mxu0 0.0
        %381 = vmatpush.msra.mxu0 0.0
        %382 = vmatpush.msra.mxu0 0.0
        %383 = vmatpush.msra.mxu0 0.0
        %384 = vmatpush.msra.mxu0 0.0
        %385 = vmatpush.msra.mxu0 0.0
        %386 = vmatpush.msra.mxu0 0.0
        %387 = vmatpush.msra.mxu0 0.0
        %388 = vmatpush.msra.mxu0 0.0
        %389 = vmatpush.msra.mxu0 0.0
        %390 = vmatpush.msra.mxu0 0.0
        %391 = vmatpush.msra.mxu0 %v354
        %392 = vmatpush.msra.mxu0 %v353
        %393 = vmatmul.f32.gmra.mxu0 %v375
        %v394 = vpop.f32.mrf.mxu0
        %v395 = vadd.f32 0.0, %v394
        %396 = vdwg.mxu0
        %v398 = vsel %vm357, %v395, 0
        %400 = vmatpush.msra.mxu0 0.0
        %401 = vmatpush.msra.mxu0 0.0
        %402 = vmatpush.msra.mxu0 0.0
        %403 = vmatpush.msra.mxu0 0.0
        %404 = vmatpush.msra.mxu0 0.0
        %405 = vmatpush.msra.mxu0 0.0
        %406 = vmatpush.msra.mxu0 0.0
        %407 = vmatpush.msra.mxu0 0.0
        %408 = vmatpush.msra.mxu0 0.0
        %409 = vmatpush.msra.mxu0 0.0
        %410 = vmatpush.msra.mxu0 0.0
        %411 = vmatpush.msra.mxu0 0.0
        %412 = vmatpush.msra.mxu0 0.0
        %413 = vmatpush.msra.mxu0 0.0
        %414 = vmatpush.msra.mxu0 %v373
        %415 = vmatpush.msra.mxu0 %v372
        %416 = vmatmul.f32.gmra.mxu0 %v398
        %v417 = vpop.f32.mrf.mxu0
        %v418 = vadd.f32 0.0, %v417
        %419 = vdwg.mxu0
        %v420 = vand.u32 2147483647, %v418
        %v421 = vsel %vm357, %v420, 0.0
        %422 = vadd.xlane.f32.xlu0 %v421
        %v423 = vpop.xlane.xlu0 %422
        %v424 = vrot.slane %v423, 4
        %v425 = vadd.f32 %v423, %v424
        %v426 = vrot.slane %v425, 2
        %v427 = vadd.f32 %v425, %v426
        %v428 = vrot.slane %v427, 1
        %v429 = vadd.f32 %v427, %v428
        %s430 = vtos %v429
        %s431 = smul.f32 %s430, 0.0009765625
        %s432 = sadd.f32 %s370, %s431
        %vm433 = vcmask 64512
        %v434 = vsel %vm433, %v371, 0
        %436 = vmatpush.msra.mxu0 0.0
        %437 = vmatpush.msra.mxu0 0.0
        %438 = vmatpush.msra.mxu0 0.0
        %439 = vmatpush.msra.mxu0 0.0
        %440 = vmatpush.msra.mxu0 0.0
        %441 = vmatpush.msra.mxu0 0.0
        %442 = vmatpush.msra.mxu0 0.0
        %443 = vmatpush.msra.mxu0 0.0
        %444 = vmatpush.msra.mxu0 0.0
        %445 = vmatpush.msra.mxu0 0.0
        %446 = vmatpush.msra.mxu0 0.0
        %447 = vmatpush.msra.mxu0 0.0
        %448 = vmatpush.msra.mxu0 0.0
        %449 = vmatpush.msra.mxu0 0.0
        %450 = vmatpush.msra.mxu0 0.0
        %451 = vmatpush.msra.mxu0 %v418
        %452 = vmatmul.f32.gmra.mxu0 %v434
        %v453 = vpop.f32.mrf.mxu0
        %v454 = vadd.f32 0.0, %v453
        %455 = vdwg.mxu0
        %v457 = vsel %vm357, %v454, 0
        %459 = vmatpush.msra.mxu0 0.0
        %460 = vmatpush.msra.mxu0 0.0
        %461 = vmatpush.msra.mxu0 0.0
        %462 = vmatpush.msra.mxu0 0.0
        %463 = vmatpush.msra.mxu0 0.0
        %464 = vmatpush.msra.mxu0 0.0
        %465 = vmatpush.msra.mxu0 0.0
        %466 = vmatpush.msra.mxu0 0.0
        %467 = vmatpush.msra.mxu0 0.0
        %468 = vmatpush.msra.mxu0 0.0
        %469 = vmatpush.msra.mxu0 0.0
        %470 = vmatpush.msra.mxu0 0.0
        %471 = vmatpush.msra.mxu0 0.0
        %472 = vmatpush.msra.mxu0 0.0
        %473 = vmatpush.msra.mxu0 %v373
        %474 = vmatpush.msra.mxu0 %v372
        %475 = vmatmul.f32.gmra.mxu0 %v457
        %v476 = vpop.f32.mrf.mxu0
        %v477 = vadd.f32 0.0, %v476
        %478 = vdwg.mxu0
        %v479 = vand.u32 2147483647, %v477
        %v480 = vsel %vm357, %v479, 0.0
        %481 = vadd.xlane.f32.xlu0 %v480
        %v482 = vpop.xlane.xlu0 %481
        %v483 = vrot.slane %v482, 4
        %v484 = vadd.f32 %v482, %v483
        %v485 = vrot.slane %v484, 2
        %v486 = vadd.f32 %v484, %v485
        %v487 = vrot.slane %v486, 1
        %v488 = vadd.f32 %v486, %v487
        %s489 = vtos %v488
        %s490 = smul.f32 %s489, 0.001953125
        %s491 = sadd.f32 %s432, %s490
        %492 = vmatpush.msra.mxu0 0.0
        %493 = vmatpush.msra.mxu0 0.0
        %494 = vmatpush.msra.mxu0 0.0
        %495 = vmatpush.msra.mxu0 0.0
        %496 = vmatpush.msra.mxu0 0.0
        %497 = vmatpush.msra.mxu0 0.0
        %498 = vmatpush.msra.mxu0 0.0
        %499 = vmatpush.msra.mxu0 0.0
        %500 = vmatpush.msra.mxu0 0.0
        %501 = vmatpush.msra.mxu0 0.0
        %502 = vmatpush.msra.mxu0 0.0
        %503 = vmatpush.msra.mxu0 0.0
        %504 = vmatpush.msra.mxu0 0.0
        %505 = vmatpush.msra.mxu0 0.0
        %506 = vmatpush.msra.mxu0 0.0
        %507 = vmatpush.msra.mxu0 %v477
        %508 = vmatmul.f32.gmra.mxu0 %v434
        %v509 = vpop.f32.mrf.mxu0
        %v510 = vadd.f32 0.0, %v509
        %511 = vdwg.mxu0
        %v513 = vsel %vm357, %v510, 0
        %515 = vmatpush.msra.mxu0 0.0
        %516 = vmatpush.msra.mxu0 0.0
        %517 = vmatpush.msra.mxu0 0.0
        %518 = vmatpush.msra.mxu0 0.0
        %519 = vmatpush.msra.mxu0 0.0
        %520 = vmatpush.msra.mxu0 0.0
        %521 = vmatpush.msra.mxu0 0.0
        %522 = vmatpush.msra.mxu0 0.0
        %523 = vmatpush.msra.mxu0 0.0
        %524 = vmatpush.msra.mxu0 0.0
        %525 = vmatpush.msra.mxu0 0.0
        %526 = vmatpush.msra.mxu0 0.0
        %527 = vmatpush.msra.mxu0 0.0
        %528 = vmatpush.msra.mxu0 0.0
        %529 = vmatpush.msra.mxu0 %v373
        %530 = vmatpush.msra.mxu0 %v372
        %531 = vmatmul.f32.gmra.mxu0 %v513
        %v532 = vpop.f32.mrf.mxu0
        %v533 = vadd.f32 0.0, %v532
        %534 = vdwg.mxu0
        %v535 = vand.u32 2147483647, %v533
        %v536 = vsel %vm357, %v535, 0.0
        %537 = vadd.xlane.f32.xlu0 %v536
        %v538 = vpop.xlane.xlu0 %537
        %v539 = vrot.slane %v538, 4
        %v540 = vadd.f32 %v538, %v539
        %v541 = vrot.slane %v540, 2
        %v542 = vadd.f32 %v540, %v541
        %v543 = vrot.slane %v542, 1
        %v544 = vadd.f32 %v542, %v543
        %s545 = vtos %v544
        %s546 = smul.f32 %s545, 0.00390625
        %s547 = sadd.f32 %s491, %s546
        %548 = vmatpush.msra.mxu0 0.0
        %549 = vmatpush.msra.mxu0 0.0
        %550 = vmatpush.msra.mxu0 0.0
        %551 = vmatpush.msra.mxu0 0.0
        %552 = vmatpush.msra.mxu0 0.0
        %553 = vmatpush.msra.mxu0 0.0
        %554 = vmatpush.msra.mxu0 0.0
        %555 = vmatpush.msra.mxu0 0.0
        %556 = vmatpush.msra.mxu0 0.0
        %557 = vmatpush.msra.mxu0 0.0
        %558 = vmatpush.msra.mxu0 0.0
        %559 = vmatpush.msra.mxu0 0.0
        %560 = vmatpush.msra.mxu0 0.0
        %561 = vmatpush.msra.mxu0 0.0
        %562 = vmatpush.msra.mxu0 0.0
        %563 = vmatpush.msra.mxu0 %v533
        %564 = vmatmul.f32.gmra.mxu0 %v434
        %v565 = vpop.f32.mrf.mxu0
        %v566 = vadd.f32 0.0, %v565
        %567 = vdwg.mxu0
        %v569 = vsel %vm357, %v566, 0
        %571 = vmatpush.msra.mxu0 0.0
        %572 = vmatpush.msra.mxu0 0.0
        %573 = vmatpush.msra.mxu0 0.0
        %574 = vmatpush.msra.mxu0 0.0
        %575 = vmatpush.msra.mxu0 0.0
        %576 = vmatpush.msra.mxu0 0.0
        %577 = vmatpush.msra.mxu0 0.0
        %578 = vmatpush.msra.mxu0 0.0
        %579 = vmatpush.msra.mxu0 0.0
        %580 = vmatpush.msra.mxu0 0.0
        %581 = vmatpush.msra.mxu0 0.0
        %582 = vmatpush.msra.mxu0 0.0
        %583 = vmatpush.msra.mxu0 0.0
        %584 = vmatpush.msra.mxu0 0.0
        %585 = vmatpush.msra.mxu0 %v373
        %586 = vmatpush.msra.mxu0 %v372
        %587 = vmatmul.f32.gmra.mxu0 %v569
        %v588 = vpop.f32.mrf.mxu0
        %v589 = vadd.f32 0.0, %v588
        %590 = vdwg.mxu0
        %v591 = vand.u32 2147483647, %v589
        %v592 = vsel %vm357, %v591, 0.0
        %593 = vadd.xlane.f32.xlu0 %v592
        %v594 = vpop.xlane.xlu0 %593
        %v595 = vrot.slane %v594, 4
        %v596 = vadd.f32 %v594, %v595
        %v597 = vrot.slane %v596, 2
        %v598 = vadd.f32 %v596, %v597
        %v599 = vrot.slane %v598, 1
        %v600 = vadd.f32 %v598, %v599
        %s601 = vtos %v600
        %s602 = smul.f32 %s601, 0.015625
        %s603 = sadd.f32 %s547, %s602
        %v604 = vld [vmem:[%s339] sm:$0x1]
        %v605 = vstv %s603
        %v606 = vadd.f32 %v604, %v605
        %607 = vst [vmem:[%s339] sm:$0x1] %v606
        %s608 = sand.u32 %s167, 1
        %s609 = scalar_lea.sflag [#allocation4], %s608
        %s610 = sand.u32 %s167, 1
        %s611 = scalar_lea.vmem [#allocation10], %s610
        // Predicated region
        $region57: #{tpu_custom_call.1} parent=35 // pred_check
          %p612 = pneg %p177
        $region58: #{tpu_custom_call.1} parent=35 // pred_check_branch
          %614 = sbr.rel (%p612) target = $region60
        $region59: #{tpu_custom_call.1} parent=35 // pred_region
          %616 = vsyncadd %s609, 0
          %s617 = sadd.s32 %s32, %s31
          %s618 = scalar_lea.hbm %s4, %s617
          %s620 = sshll.u32 %s611, 4
          %s621 = int_to_ptr.vmem [resolvable:$true] %s620
          %s622 = sshll.u32 %s618, 4
          %s623 = int_to_ptr.hbm [resolvable:$true] %s622
          %625 = dma.vmem_to_hbm [thread:$0]  %s621, 16, %s623, %s609
        $region60: #{tpu_custom_call.1} parent=35 // pred_fallthru
          _
      $region36: #{tpu_custom_call.1} parent=5 // pred_fallthru
        _
      %p626 = scmp.le.s32.totalorder 2, %s20
      // Predicated region
      $region61: #{tpu_custom_call.1} parent=5 // pred_check
        %p627 = pneg %p626
      $region62: #{tpu_custom_call.1} parent=5 // pred_check_branch
        %629 = sbr.rel (%p627) target = $region64
      $region63: #{tpu_custom_call.1} parent=5 // pred_region
        %s630 = ssub.s32 %s20, 2
        // Predicated region
        $region65: #{tpu_custom_call.1} parent=63 // pred_check
          %p631 = pneg %p183
        $region66: #{tpu_custom_call.1} parent=63 // pred_check_branch
          %633 = sbr.rel (%p631) target = $region68
        $region67: #{tpu_custom_call.1} parent=63 // pred_region
          %s634 = sand.u32 %s168, 1
          %s635 = scalar_lea.sflag [#allocation4], %s634
          %s636 = sand.u32 %s168, 1
          %s637 = scalar_lea.vmem [#allocation10], %s636
          %639 = dma.done %s635, 16
        $region68: #{tpu_custom_call.1} parent=63 // pred_fallthru
          _
      $region64: #{tpu_custom_call.1} parent=5 // pred_fallthru
        _
    $region6: #{tpu_custom_call.1} parent=1 // loop_footer
      %s24 = sadd.s32 1, %s20
    $region7: #{tpu_custom_call.1} parent=1 // loop_footer_branch
      %19 = sbr.rel target = $region3
    $region8: #{tpu_custom_call.1} parent=1 // loop_exit
      _
    %640 = vsyncpa [#allocation3], 1
    %s641 = scalar_lea.sflag [#allocation3], 1
    %642 = vsyncpa %s641, 1
    %643 = vsyncpa [#allocation6], 1
    %s644 = scalar_lea.sflag [#allocation6], 1
    %645 = vsyncpa %s644, 1
    %646 = vsyncpa [#allocation9], 1
    %647 = vsyncpa [#allocation4], 1
    %s648 = scalar_lea.sflag [#allocation4], 1
    %649 = vsyncpa %s648, 1

</llo_original>
